<compile_context>
chip_gen: v5e
topology: v5e:2x2
jax: 0.10.0
libtpu: 0.0.40
codegen_flags: <defaults>
</compile_context>

<pallas_src>
import functools

import jax
import jax.numpy as jnp
import numpy as np
from jax.experimental import pallas as pl
from jax.experimental.pallas import tpu as pltpu

LANE = 128  # narrow feature dims (8 / 1) are zero-padded to one full lane width


# ---------------------------------------------------------------------------
# Feature transform:  XW = X @ W   (one-off per layer, lane-padded to 128)
# ---------------------------------------------------------------------------
def _xw_kernel(x_ref, w_ref, out_ref):
    out_ref[...] = jnp.dot(
        x_ref[...], w_ref[...], preferred_element_type=jnp.float32
    ).astype(out_ref.dtype)


def feat_transform(x_bf16, w_bf16, *, tr=512):
    """bf16 (N,128) @ bf16 (128,128) -> bf16 (N,128), f32 MXU accumulation."""
    n, f = x_bf16.shape
    h = w_bf16.shape[1]
    tr = min(tr, n)
    assert n % tr == 0, "pad N to a multiple of the row tile"
    return pl.pallas_call(
        _xw_kernel,
        out_shape=jax.ShapeDtypeStruct((n, h), jnp.bfloat16),
        grid_spec=pltpu.PrefetchScalarGridSpec(
            num_scalar_prefetch=0,
            grid=(n // tr,),
            in_specs=[
                pl.BlockSpec((tr, f), lambda i: (i, 0)),   # feature row tile
                pl.BlockSpec((f, h), lambda i: (0, 0)),    # weight (resident)
            ],
            out_specs=pl.BlockSpec((tr, h), lambda i: (i, 0)),
        ),
        compiler_params=pltpu.CompilerParams(dimension_semantics=("parallel",)),
    )(x_bf16, w_bf16)


# ---------------------------------------------------------------------------
# Aggregation:  out = Ahat @ XW + b   (block-sparse over adjacency tiles)
# ---------------------------------------------------------------------------
def _gcn_agg_kernel(kcols_ref, knnz_ref, adj_ref, xw_ref, b_ref, out_ref, *,
                    apply_relu):
    i = pl.program_id(0)
    t = pl.program_id(1)

    @pl.when(t == 0)
    def _init():
        out_ref[...] = jnp.zeros_like(out_ref)

    # Padded steps (t >= knnz[i]) repeat the previous tile index in the
    # index_map (so their DMA is elided) and this guard skips their MXU work.
    @pl.when(t < knnz_ref[i])
    def _accumulate():
        out_ref[...] += jnp.dot(adj_ref[...], xw_ref[...],
                                preferred_element_type=jnp.float32)

    @pl.when(t == pl.num_programs(1) - 1)
    def _finalize():
        res = out_ref[...] + b_ref[...]           # bias added once, after reduce
        if apply_relu:
            res = jnp.maximum(res, 0.0)
        out_ref[...] = res


def gcn_aggregate(adj_bf16, kcols, knnz, xw_bf16, bias, *, apply_relu,
                  tm=512, tk=2048, vmem_limit_bytes=None):
    """One GraphConv aggregation: f32 (N,128) = Ahat(bf16) @ XW(bf16) + b."""
    n = adj_bf16.shape[0]
    h = xw_bf16.shape[1]
    tm = min(tm, n)
    tk = min(tk, n)
    assert n % tm == 0 and n % tk == 0, "pad N to a multiple of the tile sizes"
    nrb = n // tm
    assert kcols.shape[0] == nrb and knnz.shape[0] == nrb, \
        "block-sparse tables must be built with the same (tm, tk)"
    max_nnz = kcols.shape[1]

    kernel = functools.partial(_gcn_agg_kernel, apply_relu=apply_relu)
    visited = nrb * max_nnz                       # upper bound on visited tiles
    cost = pl.CostEstimate(
        flops=2 * visited * tm * tk * h,
        transcendentals=0,
        bytes_accessed=visited * (tm * tk + tk * h) * 2 + 2 * n * h * 4,
    )
    return pl.pallas_call(
        kernel,
        out_shape=jax.ShapeDtypeStruct((n, h), jnp.float32),
        grid_spec=pltpu.PrefetchScalarGridSpec(
            num_scalar_prefetch=2,                # kcols, knnz -> SMEM
            grid=(nrb, max_nnz),
            in_specs=[
                # adjacency tile: data-dependent column-tile index from kcols
                pl.BlockSpec((tm, tk), lambda i, t, kc, kn: (i, kc[i, t])),
                # matching XW row block (bf16 stream)
                pl.BlockSpec((tk, h), lambda i, t, kc, kn: (kc[i, t], 0)),
                # bias (VMEM-resident across all grid steps)
                pl.BlockSpec((1, h), lambda i, t, kc, kn: (0, 0)),
            ],
            # same block across t -> output acts as the f32 accumulator
            out_specs=pl.BlockSpec((tm, h), lambda i, t, kc, kn: (i, 0)),
        ),
        compiler_params=pltpu.CompilerParams(
            dimension_semantics=("parallel", "arbitrary"),
            vmem_limit_bytes=vmem_limit_bytes),
        cost_estimate=cost,
    )(kcols, knnz, adj_bf16, xw_bf16, bias)


def gcn_forward(adj_bf16, kcols, knnz, x, w1, b1, w2, b2, *,
                tm=512, tk=2048, tr=512, vmem_limit_bytes=None):
    """GraphConv -> ReLU -> GraphConv; all matmuls/aggregation in Pallas."""
    xw1 = feat_transform(x.astype(jnp.bfloat16), w1.astype(jnp.bfloat16), tr=tr)
    h = gcn_aggregate(adj_bf16, kcols, knnz, xw1, b1, apply_relu=True,
                      tm=tm, tk=tk, vmem_limit_bytes=vmem_limit_bytes)
    xw2 = feat_transform(h.astype(jnp.bfloat16), w2.astype(jnp.bfloat16), tr=tr)
    return gcn_aggregate(adj_bf16, kcols, knnz, xw2, b2, apply_relu=False,
                         tm=tm, tk=tk, vmem_limit_bytes=vmem_limit_bytes)


# ---------------------------------------------------------------------------
# Host-side helpers (graph construction, padding, block-sparse tables)
# ---------------------------------------------------------------------------
def pad_to(x, rows, cols):
    r, c = x.shape
    return jnp.zeros((rows, cols), x.dtype).at[:r, :c].set(x)


def build_normalized_adjacency(n, n_pad, extra_edges=()):
    """Undirected ring + self loops (+ chords), GCN-normalized, zero-padded."""
    a = np.zeros((n_pad, n_pad), dtype=np.float32)
    idx = np.arange(n)
    a[idx, (idx + 1) % n] = 1.0
    a[(idx + 1) % n, idx] = 1.0
    a[idx, idx] = 1.0                       # self loops avoid zero-degree nodes
    for u, v in extra_edges:
        a[u, v] = 1.0
        a[v, u] = 1.0
    deg = a[:n, :n].sum(axis=1)
    norm = 1.0 / np.sqrt(deg)
    a[:n, :n] = norm[:, None] * a[:n, :n] * norm[None, :]
    return a


def build_block_tables(adj_np, tm, tk):
    """Per row tile: compacted non-zero adjacency column-tile indices + count."""
    n = adj_np.shape[0]
    nrb, ncb = n // tm, n // tk
    blk_nz = adj_np.reshape(nrb, tm, ncb, tk).any(axis=(1, 3))
    knnz = blk_nz.sum(axis=1).astype(np.int32)
    max_nnz = max(int(knnz.max()), 1)
    kcols = np.zeros((nrb, max_nnz), dtype=np.int32)
    for i in range(nrb):
        cols = np.flatnonzero(blk_nz[i])
        if cols.size == 0:
            cols = np.array([0])
        kcols[i, :cols.size] = cols
        kcols[i, cols.size:] = cols[-1]     # repeat last -> padded-step DMA elided
    return jnp.asarray(kcols), jnp.asarray(knnz)


if __name__ == "__main__":
    # Shapes implied by the module: input_dim = ndata['tensor'].shape[1],
    # hidden_dim = 8, output_dim = 1.
    N, IN_DIM, HID_DIM, OUT_DIM = 1900, 8, 8, 1
    # Demo tiles: TK is reduced from the 2048 production default only so this
    # tiny 2048-node example exercises multi-k-tile accumulation and the
    # block-sparse skip path; keep N_PAD/TM >= 2 so v7x megacore has work.
    TM, TK, TR = 512, 512, 512
    tile_lcm = int(np.lcm.reduce([TM, TK, TR]))
    N_PAD = ((N + tile_lcm - 1) // tile_lcm) * tile_lcm

    key = jax.random.PRNGKey(0)
    k_x, k_w1, k_b1, k_w2, k_b2 = jax.random.split(key, 5)

    x = jax.random.normal(k_x, (N, IN_DIM), dtype=jnp.float32)

    # Glorot-uniform-style weights (DGL GraphConv uses xavier_uniform_); small
    # non-zero biases to exercise the bias path.
    lim1 = float(np.sqrt(6.0 / (IN_DIM + HID_DIM)))
    w1 = jax.random.uniform(k_w1, (IN_DIM, HID_DIM), jnp.float32, -lim1, lim1)
    b1 = 0.1 * jax.random.normal(k_b1, (1, HID_DIM), dtype=jnp.float32)
    lim2 = float(np.sqrt(6.0 / (HID_DIM + OUT_DIM)))
    w2 = jax.random.uniform(k_w2, (HID_DIM, OUT_DIM), jnp.float32, -lim2, lim2)
    b2 = 0.1 * jax.random.normal(k_b2, (1, OUT_DIM), dtype=jnp.float32)

    # Zero-pad narrow feature dims to 128 lanes (exactly preserves the math).
    x_p = pad_to(x, N_PAD, LANE)
    w1_p = pad_to(w1, LANE, LANE)
    b1_p = pad_to(b1, 1, LANE)
    w2_p = pad_to(w2, LANE, LANE)
    b2_p = pad_to(b2, 1, LANE)

    # Ring + self loops + one long-range chord (makes the block structure
    # irregular so the skip/padded path is actually exercised).
    adj_np = build_normalized_adjacency(N, N_PAD, extra_edges=((0, 1200),))
    kcols, knnz = build_block_tables(adj_np, TM, TK)
    adj_bf16 = jnp.asarray(adj_np).astype(jnp.bfloat16)   # halve the N^2 stream

    out_full = gcn_forward(adj_bf16, kcols, knnz, x_p, w1_p, b1_p, w2_p, b2_p,
                           tm=TM, tk=TK, tr=TR)
    out_full = jax.block_until_ready(out_full)
    out = np.asarray(out_full)[:N, :OUT_DIM]

    # Pure-JAX reference with the SAME bf16 rounding of adjacency / XW streams
    # and f32 accumulation everywhere.
    x_bf = x_p.astype(jnp.bfloat16)
    w1_bf = w1_p.astype(jnp.bfloat16)
    w2_bf = w2_p.astype(jnp.bfloat16)
    xw1_ref = jnp.dot(x_bf, w1_bf,
                      preferred_element_type=jnp.float32).astype(jnp.bfloat16)
    h_ref = jnp.maximum(
        jnp.dot(adj_bf16, xw1_ref, preferred_element_type=jnp.float32) + b1_p,
        0.0)
    xw2_ref = jnp.dot(h_ref.astype(jnp.bfloat16), w2_bf,
                      preferred_element_type=jnp.float32).astype(jnp.bfloat16)
    ref_full = jnp.dot(adj_bf16, xw2_ref,
                       preferred_element_type=jnp.float32) + b2_p
    ref = np.asarray(ref_full)[:N, :OUT_DIM]

    # Tolerances account for accumulation-order / rare 1-ulp bf16 boundary
    # differences between the tiled kernel and the monolithic reference.
    np.testing.assert_allclose(out, ref, rtol=1e-2, atol=5e-3)
    assert out.shape == (N, OUT_DIM)

    print("KERNEL_OK")
</pallas_src>

<mosaic_0001>
module attributes {stable_mosaic.version = 11 : i64} {
  func.func @_xw_kernel(%arg0: i32, %arg1: memref<512x128xbf16, #tpu.memory_space<vmem>>, %arg2: memref<128x128xbf16, #tpu.memory_space<vmem>>, %arg3: memref<512x128xbf16, #tpu.memory_space<vmem>>) attributes {dimension_semantics = [#tpu.dimension_semantics<parallel>], iteration_bounds = array<i64: 4>, scalar_prefetch = 0 : i64, scratch_operands = 0 : i64, tpu.core_type = #tpu.core_type<tc>, window_params = [{transform_indices = @transform_0, window_bounds = array<i64: 512, 128>}, {pipeline_mode = #tpu.pipeline_mode<synchronous>, transform_indices = @transform_1, window_bounds = array<i64: 128, 128>}, {transform_indices = @transform_2, window_bounds = array<i64: 512, 128>}]} {
    %c0 = arith.constant 0 : index
    %c0_0 = arith.constant 0 : index
    %0 = vector.load %arg1[%c0, %c0_0] : memref<512x128xbf16, #tpu.memory_space<vmem>>, vector<512x128xbf16>
    %c0_1 = arith.constant 0 : index
    %c0_2 = arith.constant 0 : index
    %1 = vector.load %arg2[%c0_1, %c0_2] : memref<128x128xbf16, #tpu.memory_space<vmem>>, vector<128x128xbf16>
    %cst = arith.constant dense<0.000000e+00> : vector<512x128xf32>
    %2 = tpu.matmul %0, %1, %cst {dimension_numbers = #tpu.dot_dimension_numbers<[1], [0], [0], [1], [0, 0, 1, 1], [], []>} : vector<512x128xbf16>, vector<128x128xbf16>, vector<512x128xf32> -> vector<512x128xf32>
    %3 = arith.truncf %2 : vector<512x128xf32> to vector<512x128xbf16>
    %c0_3 = arith.constant 0 : index
    %c0_4 = arith.constant 0 : index
    %4 = vector.load %arg3[%c0_3, %c0_4] : memref<512x128xbf16, #tpu.memory_space<vmem>>, vector<512x128xbf16>
    tpu.vector_store %arg3[%c0_3, %c0_4], %3 {strides = array<i32>} : memref<512x128xbf16, #tpu.memory_space<vmem>>, vector<512x128xbf16>,
    return
  }
  func.func @transform_0(%arg0: i32) -> (i32, i32) {
    %c0_i32 = arith.constant 0 : i32
    %c0_i32_0 = arith.constant 0 : i32
    return %arg0, %c0_i32 : i32, i32
  }
  func.func @transform_1(%arg0: i32) -> (i32, i32) {
    %c0_i32 = arith.constant 0 : i32
    %c0_i32_0 = arith.constant 0 : i32
    %c0_i32_1 = arith.constant 0 : i32
    return %c0_i32, %c0_i32_0 : i32, i32
  }
  func.func @transform_2(%arg0: i32) -> (i32, i32) {
    %c0_i32 = arith.constant 0 : i32
    %c0_i32_0 = arith.constant 0 : i32
    return %arg0, %c0_i32 : i32, i32
  }
}

</mosaic_0001>

<llo_original>
// kernel: tpu_custom_call.1
$region0: #{tpu_custom_call.1}
  #allocation0 [shape = 'u32[]', space=smem, size = 0x4, offset = 0x4, fixed_abs, tag = 'smem constant byte address 0x4 - core index']
  #allocation1 [shape = 'u32[72,128]{1,0:T(1,128)}', space=vmem, size = 0x9000, scoped, tag = 'internal scratch']
  %s0 = inlined_call_operand.hbm [shape: bf16[2048,128], index: 0, kind: input, shape index: {}]
  %s1 = inlined_call_operand.hbm [shape: bf16[128,128], index: 1, kind: input, shape index: {}]
  %s2 = inlined_call_operand.hbm [shape: bf16[2048,128], index: 2, kind: output, shape index: {}]
  %s3 = sld [smem:[#allocation0]]
  $region49: #{tpu_custom_call.1} parent=0
    _
  %s5 = ssub.s32 1, %s3
  %s6 = scalar_select 0, %s5, %s3
  $region1: #{tpu_custom_call.1} parent=0
    #allocation2 [shape = 'u8[262144]{0}', space=vmem, size = 0x40000, scoped, tag = 'input window, operand 0']
    #allocation3 [shape = 's32[2]{0}', space=sflag, size = 0x8, scoped, tag = 'scoped memory for tpu_custom_call.1']
    #allocation4 [shape = 's32[2]{0}', space=sflag, size = 0x8, scoped, tag = 'scoped memory for tpu_custom_call.1']
    #allocation5 [shape = 'u8[32768]{0}', space=vmem, size = 0x8000, scoped, tag = 'input window, operand 1, single buffered']
    #allocation6 [shape = 's32[1]{0}', space=sflag, size = 0x4, scoped, tag = 'scoped memory for tpu_custom_call.1']
    #allocation7 [shape = 'u8[262144]{0}', space=vmem, size = 0x40000, scoped, tag = 'output window, operand 0']
    %7 = vsyncpa [#allocation3], 0
    %s8 = scalar_lea.sflag [#allocation3], 1
    %9 = vsyncpa %s8, 0
    %10 = vsyncpa [#allocation6], 0
    %11 = vsyncpa [#allocation4], 0
    %s12 = scalar_lea.sflag [#allocation4], 1
    %13 = vsyncpa %s12, 0
    loop: start=0, step=1, limit=6
    $region2: #{tpu_custom_call.1} parent=1 // loop_pre_header
      _
    $region3: #{tpu_custom_call.1} parent=1 // loop_header
      %s15 = sphi 0, %s19
      %p16 = scmp.ge.s32.totalorder %s15, 6
      %s25 = sphi 0, %s27
      %s28 = sphi 0, %s25
      %s29 = sphi 0, %s28
      %s45 = sphi 0, %s29
      %s49 = sphi 0, %s49
      %s51 = sphi 0, %s49
      %s52 = sphi 0, %s51
      %s66 = sphi 0, %s52
      %s72 = sphi 0, %s74
      %s75 = sphi 0, %s72
      %s76 = sphi 0, %s75
      %s92 = sphi 0, %s76
    $region4: #{tpu_custom_call.1} parent=1 // loop_header_branch
      %18 = sbr.rel (%p16) target = $region8
    $region5: #{tpu_custom_call.1} parent=1 // loop_body
      %s20 = ssub.s32 %s15, 1
      %s21 = ssub.s32 %s15, 2
      %s22 = sadd.s32 %s15, 1
      %s23 = ssub.s32 %s15, %s22
      %p24 = scmp.eq.s32.totalorder %s23, 0
      %s26 = sadd.s32 %s25, 1
      %s27 = scalar_select %p24, %s25, %s26
      %p30 = pneg %p24
      %p31 = scmp.eq.s32.totalorder %s15, 3
      %p32 = por %p30, %p31
      %p33 = scmp.ne.s32.totalorder %s25, %s28
      %p34 = scmp.eq.s32.totalorder %s15, 0
      %p35 = por %p33, %p34
      %p36 = scmp.ne.s32.totalorder %s25, %s28
      %p37 = scmp.eq.s32.totalorder %s20, 3
      %p38 = por %p36, %p37
      %p39 = scmp.ne.s32.totalorder %s28, %s29
      %p40 = scmp.eq.s32.totalorder %s20, 0
      %p41 = por %p39, %p40
      %p42 = scmp.ne.s32.totalorder %s28, %s29
      %p43 = scmp.eq.s32.totalorder %s21, 3
      %p44 = por %p42, %p43
      %p46 = scmp.ne.s32.totalorder %s29, %s45
      %p47 = scmp.eq.s32.totalorder %s21, 0
      %p48 = por %p46, %p47
      %s50 = sadd.s32 %s49, 1
      %p53 = scmp.eq.s32.totalorder %s15, 3
      %p54 = scmp.ne.s32.totalorder %s49, %s51
      %p55 = scmp.eq.s32.totalorder %s15, 0
      %p56 = por %p54, %p55
      %p57 = scmp.ne.s32.totalorder %s49, %s51
      %p58 = scmp.eq.s32.totalorder %s20, 3
      %p59 = por %p57, %p58
      %p60 = scmp.ne.s32.totalorder %s51, %s52
      %p61 = scmp.eq.s32.totalorder %s20, 0
      %p62 = por %p60, %p61
      %p63 = scmp.ne.s32.totalorder %s51, %s52
      %p64 = scmp.eq.s32.totalorder %s21, 3
      %p65 = por %p63, %p64
      %p67 = scmp.ne.s32.totalorder %s52, %s66
      %p68 = scmp.eq.s32.totalorder %s21, 0
      %p69 = por %p67, %p68
      %s70 = ssub.s32 %s15, %s22
      %p71 = scmp.eq.s32.totalorder %s70, 0
      %s73 = sadd.s32 %s72, 1
      %s74 = scalar_select %p71, %s72, %s73
      %p77 = pneg %p71
      %p78 = scmp.eq.s32.totalorder %s15, 3
      %p79 = por %p77, %p78
      %p80 = scmp.ne.s32.totalorder %s72, %s75
      %p81 = scmp.eq.s32.totalorder %s15, 0
      %p82 = por %p80, %p81
      %p83 = scmp.ne.s32.totalorder %s72, %s75
      %p84 = scmp.eq.s32.totalorder %s20, 3
      %p85 = por %p83, %p84
      %p86 = scmp.ne.s32.totalorder %s75, %s76
      %p87 = scmp.eq.s32.totalorder %s20, 0
      %p88 = por %p86, %p87
      %p89 = scmp.ne.s32.totalorder %s75, %s76
      %p90 = scmp.eq.s32.totalorder %s21, 3
      %p91 = por %p89, %p90
      %p93 = scmp.ne.s32.totalorder %s76, %s92
      %p94 = scmp.eq.s32.totalorder %s21, 0
      %p95 = por %p93, %p94
      %p96 = scmp.le.s32.totalorder 1, %s15
      %p97 = scmp.lt.s32.totalorder %s15, 5
      %p98 = pnand %p96, %p97
      %p99 = pneg %p98
      // Predicated region
      $region9: #{tpu_custom_call.1} parent=5 // pred_check
        _
      $region10: #{tpu_custom_call.1} parent=5 // pred_check_branch
        %101 = sbr.rel (%p98) target = $region12
      $region11: #{tpu_custom_call.1} parent=5 // pred_region
        %s102 = ssub.s32 %s15, 1
        // Predicated region
        $region13: #{tpu_custom_call.1} parent=11 // pred_check
          %p103 = pneg %p62
        $region14: #{tpu_custom_call.1} parent=11 // pred_check_branch
          %105 = sbr.rel (%p103) target = $region16
        $region15: #{tpu_custom_call.1} parent=11 // pred_region
          %107 = vsyncadd [#allocation6], 0
          %s108 = sshll.u32 %s1, 4
          %s109 = int_to_ptr.hbm [resolvable:$true] %s108
          %s110 = sshll.u32 [#allocation5], 4
          %s111 = int_to_ptr.vmem [resolvable:$true] %s110
          %116 = dma.hbm_to_vmem [thread:$0]  %s109, 1024, %s111, [#allocation6], 64, 64, 4
        $region16: #{tpu_custom_call.1} parent=11 // pred_fallthru
          _
      $region12: #{tpu_custom_call.1} parent=5 // pred_fallthru
        _
      %p117 = scmp.lt.s32.totalorder %s15, 4
      // Predicated region
      $region17: #{tpu_custom_call.1} parent=5 // pred_check
        %p118 = pneg %p117
      $region18: #{tpu_custom_call.1} parent=5 // pred_check_branch
        %120 = sbr.rel (%p118) target = $region20
      $region19: #{tpu_custom_call.1} parent=5 // pred_region
        // Predicated region
        $region21: #{tpu_custom_call.1} parent=19 // pred_check
          %p121 = pneg %p35
        $region22: #{tpu_custom_call.1} parent=19 // pred_check_branch
          %123 = sbr.rel (%p121) target = $region24
        $region23: #{tpu_custom_call.1} parent=19 // pred_region
          %s124 = sand.u32 %s25, 1
          %s125 = scalar_lea.sflag [#allocation3], %s124
          %s126 = sand.u32 %s25, 1
          %s127 = smul.addr %s126, 256
          %s128 = scalar_lea.vmem [#allocation2], %s127
          %s129 = smul.u32 64, %s15
          %131 = vsyncadd %s125, 0
          %s132 = smul.addr %s129, 4
          %s133 = scalar_lea.hbm %s0, %s132
          %s134 = sshll.u32 %s133, 4
          %s135 = int_to_ptr.hbm [resolvable:$true] %s134
          %s136 = sshll.u32 %s128, 4
          %s137 = int_to_ptr.vmem [resolvable:$true] %s136
          %142 = dma.hbm_to_vmem [thread:$0]  %s135, 4096, %s137, %s125, 64, 64, 4
        $region24: #{tpu_custom_call.1} parent=19 // pred_fallthru
          _
      $region20: #{tpu_custom_call.1} parent=5 // pred_fallthru
        _
      %p143 = scmp.le.s32.totalorder 1, %s15
      %p144 = scmp.lt.s32.totalorder %s15, 5
      %p145 = pnand %p143, %p144
      %p146 = pneg %p145
      // Predicated region
      $region25: #{tpu_custom_call.1} parent=5 // pred_check
        _
      $region26: #{tpu_custom_call.1} parent=5 // pred_check_branch
        %148 = sbr.rel (%p145) target = $region28
      $region27: #{tpu_custom_call.1} parent=5 // pred_region
        %s149 = ssub.s32 %s15, 1
        %s150 = sand.u32 %s28, 1
        %s151 = scalar_lea.sflag [#allocation3], %s150
        %s152 = sand.u32 %s28, 1
        %s153 = smul.addr %s152, 256
        %s154 = scalar_lea.vmem [#allocation2], %s153
        // Predicated region
        $region29: #{tpu_custom_call.1} parent=27 // pred_check
          %p155 = pneg %p41
        $region30: #{tpu_custom_call.1} parent=27 // pred_check_branch
          %157 = sbr.rel (%p155) target = $region32
        $region31: #{tpu_custom_call.1} parent=27 // pred_region
          %159 = dma.done %s151, 4096
        $region32: #{tpu_custom_call.1} parent=27 // pred_fallthru
          _
        // Predicated region
        $region33: #{tpu_custom_call.1} parent=27 // pred_check
          %p160 = pneg %p62
        $region34: #{tpu_custom_call.1} parent=27 // pred_check_branch
          %162 = sbr.rel (%p160) target = $region36
        $region35: #{tpu_custom_call.1} parent=27 // pred_region
          %164 = dma.done [#allocation6], 1024
        $region36: #{tpu_custom_call.1} parent=27 // pred_fallthru
          _
        %s165 = sand.u32 %s28, 1
        %s166 = scalar_lea.sflag [#allocation3], %s165
        %s167 = sand.u32 %s28, 1
        %s168 = smul.addr %s167, 256
        %s169 = scalar_lea.vmem [#allocation2], %s168
        %p170 = pneg %p41
        %p171 = pneg %p38
        %p172 = pneg %p62
        %p173 = pneg %p59
        %p174 = pneg %p88
        %p175 = pneg %p85
        %s176 = sand.u32 %s75, 1
        %s177 = scalar_lea.sflag [#allocation4], %s176
        %s178 = sand.u32 %s75, 1
        %s179 = smul.addr %s178, 256
        %s180 = scalar_lea.vmem [#allocation7], %s179
        %s181 = smul.u32 64, %s20
        %s182 = smul.u32 64, %s20
        %v183 = vld [vmem:[%s154] sm:$0xf]
        %v184 = vld [vmem:[%s154 + $0x4] sm:$0xf]
        %v185 = vld [vmem:[%s154 + $0x8] sm:$0xf]
        %v186 = vld [vmem:[%s154 + $0xc] sm:$0xf]
        %v187 = vld [vmem:[%s154 + $0x10] sm:$0xf]
        %v188 = vld [vmem:[%s154 + $0x14] sm:$0xf]
        %v189 = vld [vmem:[%s154 + $0x18] sm:$0xf]
        %v190 = vld [vmem:[%s154 + $0x1c] sm:$0xf]
        %v191 = vld [vmem:[%s154 + $0x20] sm:$0xf]
        %v192 = vld [vmem:[%s154 + $0x24] sm:$0xf]
        %v193 = vld [vmem:[%s154 + $0x28] sm:$0xf]
        %v194 = vld [vmem:[%s154 + $0x2c] sm:$0xf]
        %v195 = vld [vmem:[%s154 + $0x30] sm:$0xf]
        %v196 = vld [vmem:[%s154 + $0x34] sm:$0xf]
        %v197 = vld [vmem:[%s154 + $0x38] sm:$0xf]
        %v198 = vld [vmem:[%s154 + $0x3c] sm:$0xf]
        %v199 = vld [vmem:[%s154 + $0x40] sm:$0xf]
        %v200 = vld [vmem:[%s154 + $0x44] sm:$0xf]
        %v201 = vld [vmem:[%s154 + $0x48] sm:$0xf]
        %v202 = vld [vmem:[%s154 + $0x4c] sm:$0xf]
        %v203 = vld [vmem:[%s154 + $0x50] sm:$0xf]
        %v204 = vld [vmem:[%s154 + $0x54] sm:$0xf]
        %v205 = vld [vmem:[%s154 + $0x58] sm:$0xf]
        %v206 = vld [vmem:[%s154 + $0x5c] sm:$0xf]
        %v207 = vld [vmem:[%s154 + $0x60] sm:$0xf]
        %v208 = vld [vmem:[%s154 + $0x64] sm:$0xf]
        %v209 = vld [vmem:[%s154 + $0x68] sm:$0xf]
        %v210 = vld [vmem:[%s154 + $0x6c] sm:$0xf]
        %v211 = vld [vmem:[%s154 + $0x70] sm:$0xf]
        %v212 = vld [vmem:[%s154 + $0x74] sm:$0xf]
        %v213 = vld [vmem:[%s154 + $0x78] sm:$0xf]
        %v214 = vld [vmem:[%s154 + $0x7c] sm:$0xf]
        %v215 = vld [vmem:[%s154 + $0x80] sm:$0xf]
        %v216 = vld [vmem:[%s154 + $0x84] sm:$0xf]
        %v217 = vld [vmem:[%s154 + $0x88] sm:$0xf]
        %v218 = vld [vmem:[%s154 + $0x8c] sm:$0xf]
        %v219 = vld [vmem:[%s154 + $0x90] sm:$0xf]
        %v220 = vld [vmem:[%s154 + $0x94] sm:$0xf]
        %v221 = vld [vmem:[%s154 + $0x98] sm:$0xf]
        %v222 = vld [vmem:[%s154 + $0x9c] sm:$0xf]
        %v223 = vld [vmem:[%s154 + $0xa0] sm:$0xf]
        %v224 = vld [vmem:[%s154 + $0xa4] sm:$0xf]
        %v225 = vld [vmem:[%s154 + $0xa8] sm:$0xf]
        %v226 = vld [vmem:[%s154 + $0xac] sm:$0xf]
        %v227 = vld [vmem:[%s154 + $0xb0] sm:$0xf]
        %v228 = vld [vmem:[%s154 + $0xb4] sm:$0xf]
        %v229 = vld [vmem:[%s154 + $0xb8] sm:$0xf]
        %v230 = vld [vmem:[%s154 + $0xbc] sm:$0xf]
        %v231 = vld [vmem:[%s154 + $0xc0] sm:$0xf]
        %v232 = vld [vmem:[%s154 + $0xc4] sm:$0xf]
        %v233 = vld [vmem:[%s154 + $0xc8] sm:$0xf]
        %v234 = vld [vmem:[%s154 + $0xcc] sm:$0xf]
        %v235 = vld [vmem:[%s154 + $0xd0] sm:$0xf]
        %v236 = vld [vmem:[%s154 + $0xd4] sm:$0xf]
        %v237 = vld [vmem:[%s154 + $0xd8] sm:$0xf]
        %v238 = vld [vmem:[%s154 + $0xdc] sm:$0xf]
        %v239 = vld [vmem:[%s154 + $0xe0] sm:$0xf]
        %v240 = vld [vmem:[%s154 + $0xe4] sm:$0xf]
        %v241 = vld [vmem:[%s154 + $0xe8] sm:$0xf]
        %v242 = vld [vmem:[%s154 + $0xec] sm:$0xf]
        %v243 = vld [vmem:[%s154 + $0xf0] sm:$0xf]
        %v244 = vld [vmem:[%s154 + $0xf4] sm:$0xf]
        %v245 = vld [vmem:[%s154 + $0xf8] sm:$0xf]
        %v246 = vld [vmem:[%s154 + $0xfc] sm:$0xf]
        %v247 = vld [vmem:[#allocation5] sm:$0xf]
        %v248 = vld [vmem:[#allocation5 + $0x4] sm:$0xf]
        %v249 = vld [vmem:[#allocation5 + $0x8] sm:$0xf]
        %v250 = vld [vmem:[#allocation5 + $0xc] sm:$0xf]
        %v251 = vld [vmem:[#allocation5 + $0x10] sm:$0xf]
        %v252 = vld [vmem:[#allocation5 + $0x14] sm:$0xf]
        %v253 = vld [vmem:[#allocation5 + $0x18] sm:$0xf]
        %v254 = vld [vmem:[#allocation5 + $0x1c] sm:$0xf]
        %v255 = vld [vmem:[#allocation5 + $0x20] sm:$0xf]
        %v256 = vld [vmem:[#allocation5 + $0x24] sm:$0xf]
        %v257 = vld [vmem:[#allocation5 + $0x28] sm:$0xf]
        %v258 = vld [vmem:[#allocation5 + $0x2c] sm:$0xf]
        %v259 = vld [vmem:[#allocation5 + $0x30] sm:$0xf]
        %v260 = vld [vmem:[#allocation5 + $0x34] sm:$0xf]
        %v261 = vld [vmem:[#allocation5 + $0x38] sm:$0xf]
        %v262 = vld [vmem:[#allocation5 + $0x3c] sm:$0xf]
        %v327 = vunpack.c.l.b16 %v183
        %v328 = vunpack.c.l.b16 %v184
        %v329 = vunpack.c.l.b16 %v185
        %v330 = vunpack.c.l.b16 %v186
        %v331 = vunpack.c.l.b16 %v187
        %v332 = vunpack.c.l.b16 %v188
        %v333 = vunpack.c.l.b16 %v189
        %v334 = vunpack.c.l.b16 %v190
        %v335 = vunpack.c.l.b16 %v191
        %v336 = vunpack.c.l.b16 %v192
        %v337 = vunpack.c.l.b16 %v193
        %v338 = vunpack.c.l.b16 %v194
        %v339 = vunpack.c.l.b16 %v195
        %v340 = vunpack.c.l.b16 %v196
        %v341 = vunpack.c.l.b16 %v197
        %v342 = vunpack.c.l.b16 %v198
        %v343 = vunpack.c.l.b16 %v199
        %v344 = vunpack.c.l.b16 %v200
        %v345 = vunpack.c.l.b16 %v201
        %v346 = vunpack.c.l.b16 %v202
        %v347 = vunpack.c.l.b16 %v203
        %v348 = vunpack.c.l.b16 %v204
        %v349 = vunpack.c.l.b16 %v205
        %v350 = vunpack.c.l.b16 %v206
        %v351 = vunpack.c.l.b16 %v207
        %v352 = vunpack.c.l.b16 %v208
        %v353 = vunpack.c.l.b16 %v209
        %v354 = vunpack.c.l.b16 %v210
        %v355 = vunpack.c.l.b16 %v211
        %v356 = vunpack.c.l.b16 %v212
        %v357 = vunpack.c.l.b16 %v213
        %v358 = vunpack.c.l.b16 %v214
        %v359 = vunpack.c.l.b16 %v215
        %v360 = vunpack.c.l.b16 %v216
        %v361 = vunpack.c.l.b16 %v217
        %v362 = vunpack.c.l.b16 %v218
        %v363 = vunpack.c.l.b16 %v219
        %v364 = vunpack.c.l.b16 %v220
        %v365 = vunpack.c.l.b16 %v221
        %v366 = vunpack.c.l.b16 %v222
        %v367 = vunpack.c.l.b16 %v223
        %v368 = vunpack.c.l.b16 %v224
        %v369 = vunpack.c.l.b16 %v225
        %v370 = vunpack.c.l.b16 %v226
        %v371 = vunpack.c.l.b16 %v227
        %v372 = vunpack.c.l.b16 %v228
        %v373 = vunpack.c.l.b16 %v229
        %v374 = vunpack.c.l.b16 %v230
        %v375 = vunpack.c.l.b16 %v231
        %v376 = vunpack.c.l.b16 %v232
        %v377 = vunpack.c.l.b16 %v233
        %v378 = vunpack.c.l.b16 %v234
        %v379 = vunpack.c.l.b16 %v235
        %v380 = vunpack.c.l.b16 %v236
        %v381 = vunpack.c.l.b16 %v237
        %v382 = vunpack.c.l.b16 %v238
        %v383 = vunpack.c.l.b16 %v239
        %v384 = vunpack.c.l.b16 %v240
        %v385 = vunpack.c.l.b16 %v241
        %v386 = vunpack.c.l.b16 %v242
        %v387 = vunpack.c.l.b16 %v243
        %v388 = vunpack.c.l.b16 %v244
        %v389 = vunpack.c.l.b16 %v245
        %v390 = vunpack.c.l.b16 %v246
        %v391 = vpack.c.b16 %v328, %v327
        %v392 = vpack.c.b16 %v330, %v329
        %v393 = vpack.c.b16 %v332, %v331
        %v394 = vpack.c.b16 %v334, %v333
        %v395 = vpack.c.b16 %v336, %v335
        %v396 = vpack.c.b16 %v338, %v337
        %v397 = vpack.c.b16 %v340, %v339
        %v398 = vpack.c.b16 %v342, %v341
        %v399 = vpack.c.b16 %v344, %v343
        %v400 = vpack.c.b16 %v346, %v345
        %v401 = vpack.c.b16 %v348, %v347
        %v402 = vpack.c.b16 %v350, %v349
        %v403 = vpack.c.b16 %v352, %v351
        %v404 = vpack.c.b16 %v354, %v353
        %v405 = vpack.c.b16 %v356, %v355
        %v406 = vpack.c.b16 %v358, %v357
        %v407 = vpack.c.b16 %v360, %v359
        %v408 = vpack.c.b16 %v362, %v361
        %v409 = vpack.c.b16 %v364, %v363
        %v410 = vpack.c.b16 %v366, %v365
        %v411 = vpack.c.b16 %v368, %v367
        %v412 = vpack.c.b16 %v370, %v369
        %v413 = vpack.c.b16 %v372, %v371
        %v414 = vpack.c.b16 %v374, %v373
        %v415 = vpack.c.b16 %v376, %v375
        %v416 = vpack.c.b16 %v378, %v377
        %v417 = vpack.c.b16 %v380, %v379
        %v418 = vpack.c.b16 %v382, %v381
        %v419 = vpack.c.b16 %v384, %v383
        %v420 = vpack.c.b16 %v386, %v385
        %v421 = vpack.c.b16 %v388, %v387
        %v422 = vpack.c.b16 %v390, %v389
        %v471 = vunpack.c.l.b16 %v247
        %v472 = vunpack.c.l.b16 %v248
        %v473 = vunpack.c.l.b16 %v249
        %v474 = vunpack.c.l.b16 %v250
        %v475 = vunpack.c.l.b16 %v251
        %v476 = vunpack.c.l.b16 %v252
        %v477 = vunpack.c.l.b16 %v253
        %v478 = vunpack.c.l.b16 %v254
        %v479 = vunpack.c.l.b16 %v255
        %v480 = vunpack.c.l.b16 %v256
        %v481 = vunpack.c.l.b16 %v257
        %v482 = vunpack.c.l.b16 %v258
        %v483 = vunpack.c.l.b16 %v259
        %v484 = vunpack.c.l.b16 %v260
        %v485 = vunpack.c.l.b16 %v261
        %v486 = vunpack.c.l.b16 %v262
        %v487 = vpack.c.b16 %v472, %v471
        %v488 = vpack.c.b16 %v474, %v473
        %v489 = vpack.c.b16 %v476, %v475
        %v490 = vpack.c.b16 %v478, %v477
        %v491 = vpack.c.b16 %v480, %v479
        %v492 = vpack.c.b16 %v482, %v481
        %v493 = vpack.c.b16 %v484, %v483
        %v494 = vpack.c.b16 %v486, %v485
        %503 = vmatpush.bf16.msra.mxu0 %v494
        %504 = vmatpush.bf16.msra.mxu0 %v493
        %505 = vmatpush.bf16.msra.mxu0 %v492
        %506 = vmatpush.bf16.msra.mxu0 %v491
        %507 = vmatpush.bf16.msra.mxu0 %v490
        %508 = vmatpush.bf16.msra.mxu0 %v489
        %509 = vmatpush.bf16.msra.mxu0 %v488
        %510 = vmatpush.bf16.msra.mxu0 %v487
        %511 = vmatmul.bf16.gmra.mxu0 %v391
        %v512 = vpop.f32.mrf.mxu0
        %v513 = vadd.f32 0.0, %v512
        %v514 = vpop.f32.mrf.mxu0
        %v515 = vadd.f32 0.0, %v514
        %516 = vmatmul.bf16.gmra.mxu0 %v392
        %v517 = vpop.f32.mrf.mxu0
        %v518 = vadd.f32 0.0, %v517
        %v519 = vpop.f32.mrf.mxu0
        %v520 = vadd.f32 0.0, %v519
        %521 = vmatmul.bf16.gmra.mxu0 %v393
        %v522 = vpop.f32.mrf.mxu0
        %v523 = vadd.f32 0.0, %v522
        %v524 = vpop.f32.mrf.mxu0
        %v525 = vadd.f32 0.0, %v524
        %526 = vmatmul.bf16.gmra.mxu0 %v394
        %v527 = vpop.f32.mrf.mxu0
        %v528 = vadd.f32 0.0, %v527
        %v529 = vpop.f32.mrf.mxu0
        %v530 = vadd.f32 0.0, %v529
        %531 = vmatmul.bf16.gmra.mxu0 %v395
        %v532 = vpop.f32.mrf.mxu0
        %v533 = vadd.f32 0.0, %v532
        %v534 = vpop.f32.mrf.mxu0
        %v535 = vadd.f32 0.0, %v534
        %536 = vmatmul.bf16.gmra.mxu0 %v396
        %v537 = vpop.f32.mrf.mxu0
        %v538 = vadd.f32 0.0, %v537
        %v539 = vpop.f32.mrf.mxu0
        %v540 = vadd.f32 0.0, %v539
        %541 = vmatmul.bf16.gmra.mxu0 %v397
        %v542 = vpop.f32.mrf.mxu0
        %v543 = vadd.f32 0.0, %v542
        %v544 = vpop.f32.mrf.mxu0
        %v545 = vadd.f32 0.0, %v544
        %546 = vmatmul.bf16.gmra.mxu0 %v398
        %v547 = vpop.f32.mrf.mxu0
        %v548 = vadd.f32 0.0, %v547
        %v549 = vpop.f32.mrf.mxu0
        %v550 = vadd.f32 0.0, %v549
        %551 = vmatmul.bf16.gmra.mxu0 %v399
        %v552 = vpop.f32.mrf.mxu0
        %v553 = vadd.f32 0.0, %v552
        %v554 = vpop.f32.mrf.mxu0
        %v555 = vadd.f32 0.0, %v554
        %556 = vmatmul.bf16.gmra.mxu0 %v400
        %v557 = vpop.f32.mrf.mxu0
        %v558 = vadd.f32 0.0, %v557
        %v559 = vpop.f32.mrf.mxu0
        %v560 = vadd.f32 0.0, %v559
        %561 = vmatmul.bf16.gmra.mxu0 %v401
        %v562 = vpop.f32.mrf.mxu0
        %v563 = vadd.f32 0.0, %v562
        %v564 = vpop.f32.mrf.mxu0
        %v565 = vadd.f32 0.0, %v564
        %566 = vmatmul.bf16.gmra.mxu0 %v402
        %v567 = vpop.f32.mrf.mxu0
        %v568 = vadd.f32 0.0, %v567
        %v569 = vpop.f32.mrf.mxu0
        %v570 = vadd.f32 0.0, %v569
        %571 = vmatmul.bf16.gmra.mxu0 %v403
        %v572 = vpop.f32.mrf.mxu0
        %v573 = vadd.f32 0.0, %v572
        %v574 = vpop.f32.mrf.mxu0
        %v575 = vadd.f32 0.0, %v574
        %576 = vmatmul.bf16.gmra.mxu0 %v404
        %v577 = vpop.f32.mrf.mxu0
        %v578 = vadd.f32 0.0, %v577
        %v579 = vpop.f32.mrf.mxu0
        %v580 = vadd.f32 0.0, %v579
        %581 = vmatmul.bf16.gmra.mxu0 %v405
        %v582 = vpop.f32.mrf.mxu0
        %v583 = vadd.f32 0.0, %v582
        %v584 = vpop.f32.mrf.mxu0
        %v585 = vadd.f32 0.0, %v584
        %586 = vmatmul.bf16.gmra.mxu0 %v406
        %v587 = vpop.f32.mrf.mxu0
        %v588 = vadd.f32 0.0, %v587
        %v589 = vpop.f32.mrf.mxu0
        %v590 = vadd.f32 0.0, %v589
        %591 = vmatmul.bf16.gmra.mxu0 %v407
        %v592 = vpop.f32.mrf.mxu0
        %v593 = vadd.f32 0.0, %v592
        %v594 = vpop.f32.mrf.mxu0
        %v595 = vadd.f32 0.0, %v594
        %596 = vmatmul.bf16.gmra.mxu0 %v408
        %v597 = vpop.f32.mrf.mxu0
        %v598 = vadd.f32 0.0, %v597
        %v599 = vpop.f32.mrf.mxu0
        %v600 = vadd.f32 0.0, %v599
        %601 = vmatmul.bf16.gmra.mxu0 %v409
        %v602 = vpop.f32.mrf.mxu0
        %v603 = vadd.f32 0.0, %v602
        %v604 = vpop.f32.mrf.mxu0
        %v605 = vadd.f32 0.0, %v604
        %606 = vmatmul.bf16.gmra.mxu0 %v410
        %v607 = vpop.f32.mrf.mxu0
        %v608 = vadd.f32 0.0, %v607
        %v609 = vpop.f32.mrf.mxu0
        %v610 = vadd.f32 0.0, %v609
        %611 = vmatmul.bf16.gmra.mxu0 %v411
        %v612 = vpop.f32.mrf.mxu0
        %v613 = vadd.f32 0.0, %v612
        %v614 = vpop.f32.mrf.mxu0
        %v615 = vadd.f32 0.0, %v614
        %616 = vmatmul.bf16.gmra.mxu0 %v412
        %v617 = vpop.f32.mrf.mxu0
        %v618 = vadd.f32 0.0, %v617
        %v619 = vpop.f32.mrf.mxu0
        %v620 = vadd.f32 0.0, %v619
        %621 = vmatmul.bf16.gmra.mxu0 %v413
        %v622 = vpop.f32.mrf.mxu0
        %v623 = vadd.f32 0.0, %v622
        %v624 = vpop.f32.mrf.mxu0
        %v625 = vadd.f32 0.0, %v624
        %626 = vmatmul.bf16.gmra.mxu0 %v414
        %v627 = vpop.f32.mrf.mxu0
        %v628 = vadd.f32 0.0, %v627
        %v629 = vpop.f32.mrf.mxu0
        %v630 = vadd.f32 0.0, %v629
        %631 = vmatmul.bf16.gmra.mxu0 %v415
        %v632 = vpop.f32.mrf.mxu0
        %v633 = vadd.f32 0.0, %v632
        %v634 = vpop.f32.mrf.mxu0
        %v635 = vadd.f32 0.0, %v634
        %636 = vmatmul.bf16.gmra.mxu0 %v416
        %v637 = vpop.f32.mrf.mxu0
        %v638 = vadd.f32 0.0, %v637
        %v639 = vpop.f32.mrf.mxu0
        %v640 = vadd.f32 0.0, %v639
        %641 = vmatmul.bf16.gmra.mxu0 %v417
        %v642 = vpop.f32.mrf.mxu0
        %v643 = vadd.f32 0.0, %v642
        %v644 = vpop.f32.mrf.mxu0
        %v645 = vadd.f32 0.0, %v644
        %646 = vmatmul.bf16.gmra.mxu0 %v418
        %v647 = vpop.f32.mrf.mxu0
        %v648 = vadd.f32 0.0, %v647
        %v649 = vpop.f32.mrf.mxu0
        %v650 = vadd.f32 0.0, %v649
        %651 = vmatmul.bf16.gmra.mxu0 %v419
        %v652 = vpop.f32.mrf.mxu0
        %v653 = vadd.f32 0.0, %v652
        %v654 = vpop.f32.mrf.mxu0
        %v655 = vadd.f32 0.0, %v654
        %656 = vmatmul.bf16.gmra.mxu0 %v420
        %v657 = vpop.f32.mrf.mxu0
        %v658 = vadd.f32 0.0, %v657
        %v659 = vpop.f32.mrf.mxu0
        %v660 = vadd.f32 0.0, %v659
        %661 = vmatmul.bf16.gmra.mxu0 %v421
        %v662 = vpop.f32.mrf.mxu0
        %v663 = vadd.f32 0.0, %v662
        %v664 = vpop.f32.mrf.mxu0
        %v665 = vadd.f32 0.0, %v664
        %666 = vmatmul.bf16.gmra.mxu0 %v422
        %v667 = vpop.f32.mrf.mxu0
        %v668 = vadd.f32 0.0, %v667
        %v669 = vpop.f32.mrf.mxu0
        %v670 = vadd.f32 0.0, %v669
        %671 = vdwg.mxu0
        %v672 = vpack.c.bf16 %v513, %v513
        %v673 = vpack.c.bf16 %v515, %v515
        %v674 = vpack.c.bf16 %v518, %v518
        %v675 = vpack.c.bf16 %v520, %v520
        %v676 = vpack.c.bf16 %v523, %v523
        %v677 = vpack.c.bf16 %v525, %v525
        %v678 = vpack.c.bf16 %v528, %v528
        %v679 = vpack.c.bf16 %v530, %v530
        %v680 = vpack.c.bf16 %v533, %v533
        %v681 = vpack.c.bf16 %v535, %v535
        %v682 = vpack.c.bf16 %v538, %v538
        %v683 = vpack.c.bf16 %v540, %v540
        %v684 = vpack.c.bf16 %v543, %v543
        %v685 = vpack.c.bf16 %v545, %v545
        %v686 = vpack.c.bf16 %v548, %v548
        %v687 = vpack.c.bf16 %v550, %v550
        %v688 = vpack.c.bf16 %v553, %v553
        %v689 = vpack.c.bf16 %v555, %v555
        %v690 = vpack.c.bf16 %v558, %v558
        %v691 = vpack.c.bf16 %v560, %v560
        %v692 = vpack.c.bf16 %v563, %v563
        %v693 = vpack.c.bf16 %v565, %v565
        %v694 = vpack.c.bf16 %v568, %v568
        %v695 = vpack.c.bf16 %v570, %v570
        %v696 = vpack.c.bf16 %v573, %v573
        %v697 = vpack.c.bf16 %v575, %v575
        %v698 = vpack.c.bf16 %v578, %v578
        %v699 = vpack.c.bf16 %v580, %v580
        %v700 = vpack.c.bf16 %v583, %v583
        %v701 = vpack.c.bf16 %v585, %v585
        %v702 = vpack.c.bf16 %v588, %v588
        %v703 = vpack.c.bf16 %v590, %v590
        %v704 = vpack.c.bf16 %v593, %v593
        %v705 = vpack.c.bf16 %v595, %v595
        %v706 = vpack.c.bf16 %v598, %v598
        %v707 = vpack.c.bf16 %v600, %v600
        %v708 = vpack.c.bf16 %v603, %v603
        %v709 = vpack.c.bf16 %v605, %v605
        %v710 = vpack.c.bf16 %v608, %v608
        %v711 = vpack.c.bf16 %v610, %v610
        %v712 = vpack.c.bf16 %v613, %v613
        %v713 = vpack.c.bf16 %v615, %v615
        %v714 = vpack.c.bf16 %v618, %v618
        %v715 = vpack.c.bf16 %v620, %v620
        %v716 = vpack.c.bf16 %v623, %v623
        %v717 = vpack.c.bf16 %v625, %v625
        %v718 = vpack.c.bf16 %v628, %v628
        %v719 = vpack.c.bf16 %v630, %v630
        %v720 = vpack.c.bf16 %v633, %v633
        %v721 = vpack.c.bf16 %v635, %v635
        %v722 = vpack.c.bf16 %v638, %v638
        %v723 = vpack.c.bf16 %v640, %v640
        %v724 = vpack.c.bf16 %v643, %v643
        %v725 = vpack.c.bf16 %v645, %v645
        %v726 = vpack.c.bf16 %v648, %v648
        %v727 = vpack.c.bf16 %v650, %v650
        %v728 = vpack.c.bf16 %v653, %v653
        %v729 = vpack.c.bf16 %v655, %v655
        %v730 = vpack.c.bf16 %v658, %v658
        %v731 = vpack.c.bf16 %v660, %v660
        %v732 = vpack.c.bf16 %v663, %v663
        %v733 = vpack.c.bf16 %v665, %v665
        %v734 = vpack.c.bf16 %v668, %v668
        %v735 = vpack.c.bf16 %v670, %v670
        %736 = vst [vmem:[%s180] sm:$0xf] %v672
        %737 = vst [vmem:[%s180 + $0x4] sm:$0xf] %v673
        %738 = vst [vmem:[%s180 + $0x8] sm:$0xf] %v674
        %739 = vst [vmem:[%s180 + $0xc] sm:$0xf] %v675
        %740 = vst [vmem:[%s180 + $0x10] sm:$0xf] %v676
        %741 = vst [vmem:[%s180 + $0x14] sm:$0xf] %v677
        %742 = vst [vmem:[%s180 + $0x18] sm:$0xf] %v678
        %743 = vst [vmem:[%s180 + $0x1c] sm:$0xf] %v679
        %744 = vst [vmem:[%s180 + $0x20] sm:$0xf] %v680
        %745 = vst [vmem:[%s180 + $0x24] sm:$0xf] %v681
        %746 = vst [vmem:[%s180 + $0x28] sm:$0xf] %v682
        %747 = vst [vmem:[%s180 + $0x2c] sm:$0xf] %v683
        %748 = vst [vmem:[%s180 + $0x30] sm:$0xf] %v684
        %749 = vst [vmem:[%s180 + $0x34] sm:$0xf] %v685
        %750 = vst [vmem:[%s180 + $0x38] sm:$0xf] %v686
        %751 = vst [vmem:[%s180 + $0x3c] sm:$0xf] %v687
        %752 = vst [vmem:[%s180 + $0x40] sm:$0xf] %v688
        %753 = vst [vmem:[%s180 + $0x44] sm:$0xf] %v689
        %754 = vst [vmem:[%s180 + $0x48] sm:$0xf] %v690
        %755 = vst [vmem:[%s180 + $0x4c] sm:$0xf] %v691
        %756 = vst [vmem:[%s180 + $0x50] sm:$0xf] %v692
        %757 = vst [vmem:[%s180 + $0x54] sm:$0xf] %v693
        %758 = vst [vmem:[%s180 + $0x58] sm:$0xf] %v694
        %759 = vst [vmem:[%s180 + $0x5c] sm:$0xf] %v695
        %760 = vst [vmem:[%s180 + $0x60] sm:$0xf] %v696
        %761 = vst [vmem:[%s180 + $0x64] sm:$0xf] %v697
        %762 = vst [vmem:[%s180 + $0x68] sm:$0xf] %v698
        %763 = vst [vmem:[%s180 + $0x6c] sm:$0xf] %v699
        %764 = vst [vmem:[%s180 + $0x70] sm:$0xf] %v700
        %765 = vst [vmem:[%s180 + $0x74] sm:$0xf] %v701
        %766 = vst [vmem:[%s180 + $0x78] sm:$0xf] %v702
        %767 = vst [vmem:[%s180 + $0x7c] sm:$0xf] %v703
        %768 = vst [vmem:[%s180 + $0x80] sm:$0xf] %v704
        %769 = vst [vmem:[%s180 + $0x84] sm:$0xf] %v705
        %770 = vst [vmem:[%s180 + $0x88] sm:$0xf] %v706
        %771 = vst [vmem:[%s180 + $0x8c] sm:$0xf] %v707
        %772 = vst [vmem:[%s180 + $0x90] sm:$0xf] %v708
        %773 = vst [vmem:[%s180 + $0x94] sm:$0xf] %v709
        %774 = vst [vmem:[%s180 + $0x98] sm:$0xf] %v710
        %775 = vst [vmem:[%s180 + $0x9c] sm:$0xf] %v711
        %776 = vst [vmem:[%s180 + $0xa0] sm:$0xf] %v712
        %777 = vst [vmem:[%s180 + $0xa4] sm:$0xf] %v713
        %778 = vst [vmem:[%s180 + $0xa8] sm:$0xf] %v714
        %779 = vst [vmem:[%s180 + $0xac] sm:$0xf] %v715
        %780 = vst [vmem:[%s180 + $0xb0] sm:$0xf] %v716
        %781 = vst [vmem:[%s180 + $0xb4] sm:$0xf] %v717
        %782 = vst [vmem:[%s180 + $0xb8] sm:$0xf] %v718
        %783 = vst [vmem:[%s180 + $0xbc] sm:$0xf] %v719
        %784 = vst [vmem:[%s180 + $0xc0] sm:$0xf] %v720
        %785 = vst [vmem:[%s180 + $0xc4] sm:$0xf] %v721
        %786 = vst [vmem:[%s180 + $0xc8] sm:$0xf] %v722
        %787 = vst [vmem:[%s180 + $0xcc] sm:$0xf] %v723
        %788 = vst [vmem:[%s180 + $0xd0] sm:$0xf] %v724
        %789 = vst [vmem:[%s180 + $0xd4] sm:$0xf] %v725
        %790 = vst [vmem:[%s180 + $0xd8] sm:$0xf] %v726
        %791 = vst [vmem:[%s180 + $0xdc] sm:$0xf] %v727
        %792 = vst [vmem:[%s180 + $0xe0] sm:$0xf] %v728
        %793 = vst [vmem:[%s180 + $0xe4] sm:$0xf] %v729
        %794 = vst [vmem:[%s180 + $0xe8] sm:$0xf] %v730
        %795 = vst [vmem:[%s180 + $0xec] sm:$0xf] %v731
        %796 = vst [vmem:[%s180 + $0xf0] sm:$0xf] %v732
        %797 = vst [vmem:[%s180 + $0xf4] sm:$0xf] %v733
        %798 = vst [vmem:[%s180 + $0xf8] sm:$0xf] %v734
        %799 = vst [vmem:[%s180 + $0xfc] sm:$0xf] %v735
        %s800 = sand.u32 %s75, 1
        %s801 = scalar_lea.sflag [#allocation4], %s800
        %s802 = sand.u32 %s75, 1
        %s803 = smul.addr %s802, 256
        %s804 = scalar_lea.vmem [#allocation7], %s803
        // Predicated region
        $region37: #{tpu_custom_call.1} parent=27 // pred_check
          %p805 = pneg %p85
        $region38: #{tpu_custom_call.1} parent=27 // pred_check_branch
          %807 = sbr.rel (%p805) target = $region40
        $region39: #{tpu_custom_call.1} parent=27 // pred_region
          %s808 = smul.u32 64, %s20
          %810 = vsyncadd %s801, 0
          %s811 = smul.addr %s808, 4
          %s812 = scalar_lea.hbm %s2, %s811
          %s813 = sshll.u32 %s804, 4
          %s814 = int_to_ptr.vmem [resolvable:$true] %s813
          %s815 = sshll.u32 %s812, 4
          %s816 = int_to_ptr.hbm [resolvable:$true] %s815
          %821 = dma.vmem_to_hbm [thread:$0]  %s814, 4096, %s816, %s801, 64, 64, 4
        $region40: #{tpu_custom_call.1} parent=27 // pred_fallthru
          _
      $region28: #{tpu_custom_call.1} parent=5 // pred_fallthru
        _
      %p822 = scmp.le.s32.totalorder 2, %s15
      // Predicated region
      $region41: #{tpu_custom_call.1} parent=5 // pred_check
        %p823 = pneg %p822
      $region42: #{tpu_custom_call.1} parent=5 // pred_check_branch
        %825 = sbr.rel (%p823) target = $region44
      $region43: #{tpu_custom_call.1} parent=5 // pred_region
        %s826 = ssub.s32 %s15, 2
        // Predicated region
        $region45: #{tpu_custom_call.1} parent=43 // pred_check
          %p827 = pneg %p91
        $region46: #{tpu_custom_call.1} parent=43 // pred_check_branch
          %829 = sbr.rel (%p827) target = $region48
        $region47: #{tpu_custom_call.1} parent=43 // pred_region
          %s830 = sand.u32 %s76, 1
          %s831 = scalar_lea.sflag [#allocation4], %s830
          %s832 = sand.u32 %s76, 1
          %s833 = smul.addr %s832, 256
          %s834 = scalar_lea.vmem [#allocation7], %s833
          %836 = dma.done %s831, 4096
        $region48: #{tpu_custom_call.1} parent=43 // pred_fallthru
          _
      $region44: #{tpu_custom_call.1} parent=5 // pred_fallthru
        _
    $region6: #{tpu_custom_call.1} parent=1 // loop_footer
      %s19 = sadd.s32 1, %s15
    $region7: #{tpu_custom_call.1} parent=1 // loop_footer_branch
      %14 = sbr.rel target = $region3
    $region8: #{tpu_custom_call.1} parent=1 // loop_exit
      _
    %837 = vsyncpa [#allocation3], 1
    %s838 = scalar_lea.sflag [#allocation3], 1
    %839 = vsyncpa %s838, 1
    %840 = vsyncpa [#allocation6], 1
    %841 = vsyncpa [#allocation4], 1
    %s842 = scalar_lea.sflag [#allocation4], 1
    %843 = vsyncpa %s842, 1

</llo_original>
